<compile_context>
chip_gen: v5e
topology: v5e:2x2
jax: 0.10.0
libtpu: 0.0.40
codegen_flags: <defaults>
</compile_context>

<pallas_src>
import functools

import jax
import jax.numpy as jnp
from jax.experimental import pallas as pl
from jax.experimental.pallas import tpu as pltpu


# ---------------------------------------------------------------------------
# Helpers
# ---------------------------------------------------------------------------
def _round_up(x, m):
    return ((x + m - 1) // m) * m


_FALLBACK_VMEM_BYTES = 64 << 20  # v7x-safe fallback if the hardware query fails


def _vmem_capacity_bytes():
    """Per-TensorCore VMEM capacity (128 MiB on v5e/v6e, 64 MiB on v7x)."""
    try:
        info = pltpu.get_tpu_info()
        cap = getattr(info, "vmem_capacity_bytes", None)
        if cap:
            return int(cap)
    except Exception:
        pass
    return _FALLBACK_VMEM_BYTES


def _choose_hw_tile(hw, c, itemsize, tile_budget_bytes=8 << 20):
    """Lane-dense (multiple-of-128) HW tile.  No even-divisibility requirement
    (remainder blocks are handled in-kernel); lane width kept >= 512 so the
    streaming passes stay near the HBM roofline."""
    hw_up = _round_up(hw, 128)
    cap = (tile_budget_bytes // max(1, c * itemsize)) // 128 * 128
    cap = max(cap, 512)
    return min(hw_up, cap)


# ---------------------------------------------------------------------------
# Fused single-pass kernel: one grid step per image, full (C, HW) slab.
# 2 HBM slab passes (read + write).  Used whenever the slab fits VMEM.
# ---------------------------------------------------------------------------
def _fused_kernel(x_ref, w1_ref, w2_ref, o_ref):
    # x_ref/o_ref: (1, C, HW) native dtype; w1_ref: (Cr, C); w2_ref: (C, Cr).
    xt = x_ref[...]
    hw = xt.shape[-1]

    # Per-channel mean / max over the (unpadded) HW axis.  The block equals the
    # full array dims, so Mosaic handles any physical lane padding and masks it
    # out of the reductions — no manual masking, no padded HBM copy.
    avg = jnp.sum(xt.astype(jnp.float32), axis=-1, keepdims=True) * (1.0 / hw)  # (1,C,1)
    mx = jnp.max(xt, axis=-1, keepdims=True).astype(jnp.float32)                # (1,C,1)

    w1 = w1_ref[...].astype(jnp.float32)   # (Cr, C)
    w2 = w2_ref[...].astype(jnp.float32)   # (C, Cr)

    # Shared MLP; second layer merged across the two pooled branches:
    #   w2@relu(w1@avg) + w2@relu(w1@mx) == w2@(relu(w1@avg) + relu(w1@mx)).
    ha = jnp.maximum(jnp.dot(w1, avg[0], preferred_element_type=jnp.float32), 0.0)
    hm = jnp.maximum(jnp.dot(w1, mx[0], preferred_element_type=jnp.float32), 0.0)
    logits = jnp.dot(w2, ha + hm, preferred_element_type=jnp.float32)            # (C, 1)
    attn = jax.nn.sigmoid(logits)[None]                                          # (1, C, 1)

    # Broadcast multiply in the input's native dtype (no full-slab f32 copy).
    o_ref[...] = (xt * attn.astype(xt.dtype)).astype(o_ref.dtype)


# ---------------------------------------------------------------------------
# Two-pass HW-tiled path (3 HBM slab passes) for slabs too big for VMEM.
# Pass 1: per-channel sum/max over HW tiles, MLP + sigmoid fused into the last
#         reduction step -> attn (B, C, 1) fp32.
# Pass 2: stream HW tiles again and scale by attn.
# ---------------------------------------------------------------------------
def _pool_attn_kernel(x_ref, w1_ref, w2_ref, attn_ref, sum_sc, max_sc, *, hw, t_hw):
    # grid = (B, NT); HW-tile reduction axis is last / 'arbitrary'.
    t = pl.program_id(1)

    @pl.when(t == 0)
    def _init():
        sum_sc[...] = jnp.zeros(sum_sc.shape, sum_sc.dtype)
        max_sc[...] = jnp.full(max_sc.shape, -jnp.inf, dtype=max_sc.dtype)

    xt = x_ref[...]                                    # (1, C, t_hw) native dtype

    if hw % t_hw:                                      # static: remainder tile exists
        # The OOB lanes of the partial last tile are undefined on read — mask
        # them out of BOTH the sum and the max.
        col = jax.lax.broadcasted_iota(jnp.int32, xt.shape, dimension=2) + t * t_hw
        valid = col < hw
        x_sum = jnp.where(valid, xt, jnp.zeros((), xt.dtype))
        x_max = jnp.where(valid, xt, jnp.asarray(-jnp.inf, xt.dtype))
    else:
        x_sum = xt
        x_max = xt

    sum_sc[...] += jnp.sum(x_sum.astype(jnp.float32), axis=-1, keepdims=True)
    max_sc[...] = jnp.maximum(
        max_sc[...], jnp.max(x_max, axis=-1, keepdims=True).astype(jnp.float32))

    @pl.when(t == pl.num_programs(1) - 1)
    def _finalize():
        avg = sum_sc[0] * (1.0 / hw)                   # (C, 1)
        mx = max_sc[0]                                 # (C, 1)
        w1 = w1_ref[...].astype(jnp.float32)           # (Cr, C)
        w2 = w2_ref[...].astype(jnp.float32)           # (C, Cr)
        ha = jnp.maximum(jnp.dot(w1, avg, preferred_element_type=jnp.float32), 0.0)
        hm = jnp.maximum(jnp.dot(w1, mx, preferred_element_type=jnp.float32), 0.0)
        logits = jnp.dot(w2, ha + hm, preferred_element_type=jnp.float32)        # (C, 1)
        attn_ref[...] = jax.nn.sigmoid(logits)[None]   # (1, C, 1) fp32


def _apply_kernel(x_ref, attn_ref, o_ref):
    # x_ref/o_ref: (1, C, T); attn_ref: (1, C, 1) fp32.  OOB lanes of a partial
    # last tile read garbage but the corresponding output lanes are dropped.
    xt = x_ref[...]
    o_ref[...] = (xt * attn_ref[...].astype(xt.dtype)).astype(o_ref.dtype)


# ---------------------------------------------------------------------------
# Wrappers
# ---------------------------------------------------------------------------
def _channel_attention_fused(x_flat, w1, w2, *, vmem_limit, donate_x=False):
    B, C, HW = x_flat.shape
    itemsize = jnp.dtype(x_flat.dtype).itemsize
    slab_bytes = C * HW * itemsize
    Cr = w1.shape[0]

    cost = pl.CostEstimate(
        flops=4 * B * C * HW + 6 * B * C * Cr,
        transcendentals=B * C,
        bytes_accessed=2 * B * slab_bytes + (w1.size + w2.size) * 4)

    extra = {"input_output_aliases": {0: 0}} if donate_x else {}
    return pl.pallas_call(
        _fused_kernel,
        out_shape=jax.ShapeDtypeStruct((B, C, HW), x_flat.dtype),
        grid_spec=pltpu.PrefetchScalarGridSpec(
            num_scalar_prefetch=0,
            grid=(B,),
            in_specs=[
                pl.BlockSpec((1, C, HW), lambda b: (b, 0, 0)),
                pl.BlockSpec(w1.shape, lambda b: (0, 0)),
                pl.BlockSpec(w2.shape, lambda b: (0, 0)),
            ],
            out_specs=pl.BlockSpec((1, C, HW), lambda b: (b, 0, 0)),
        ),
        compiler_params=pltpu.CompilerParams(
            dimension_semantics=("parallel",),
            vmem_limit_bytes=vmem_limit,
        ),
        cost_estimate=cost,
        **extra,
    )(x_flat, w1, w2)


def _channel_attention_tiled(x_flat, w1, w2, *, vmem_limit, donate_x=False,
                             tile_hw=None):
    B, C, HW = x_flat.shape
    itemsize = jnp.dtype(x_flat.dtype).itemsize
    Cr = w1.shape[0]

    t_hw = tile_hw if tile_hw is not None else _choose_hw_tile(HW, C, itemsize)
    nt = pl.cdiv(HW, t_hw)

    # Pass 1: pooled stats + fused MLP + sigmoid -> (B, C, 1) attention scale.
    pool_kernel = functools.partial(_pool_attn_kernel, hw=HW, t_hw=t_hw)
    attn = pl.pallas_call(
        pool_kernel,
        out_shape=jax.ShapeDtypeStruct((B, C, 1), jnp.float32),
        grid_spec=pltpu.PrefetchScalarGridSpec(
            num_scalar_prefetch=0,
            grid=(B, nt),
            in_specs=[
                pl.BlockSpec((1, C, t_hw), lambda b, t: (b, 0, t)),
                pl.BlockSpec(w1.shape, lambda b, t: (0, 0)),
                pl.BlockSpec(w2.shape, lambda b, t: (0, 0)),
            ],
            out_specs=pl.BlockSpec((1, C, 1), lambda b, t: (b, 0, 0)),
            scratch_shapes=[pltpu.VMEM((1, C, 1), jnp.float32),
                            pltpu.VMEM((1, C, 1), jnp.float32)],
        ),
        compiler_params=pltpu.CompilerParams(
            dimension_semantics=("parallel", "arbitrary"),
            vmem_limit_bytes=vmem_limit,
        ),
        cost_estimate=pl.CostEstimate(
            flops=2 * B * C * HW + 6 * B * C * Cr,
            transcendentals=B * C,
            bytes_accessed=B * C * HW * itemsize + B * C * 4 + (w1.size + w2.size) * 4),
    )(x_flat, w1, w2)

    # Pass 2: stream x tiles again and scale by the per-channel attention.
    extra = {"input_output_aliases": {0: 0}} if donate_x else {}
    out_flat = pl.pallas_call(
        _apply_kernel,
        out_shape=jax.ShapeDtypeStruct((B, C, HW), x_flat.dtype),
        grid_spec=pltpu.PrefetchScalarGridSpec(
            num_scalar_prefetch=0,
            grid=(B, nt),
            in_specs=[
                pl.BlockSpec((1, C, t_hw), lambda b, t: (b, 0, t)),
                pl.BlockSpec((1, C, 1), lambda b, t: (b, 0, 0)),
            ],
            out_specs=pl.BlockSpec((1, C, t_hw), lambda b, t: (b, 0, t)),
        ),
        compiler_params=pltpu.CompilerParams(
            dimension_semantics=("parallel", "parallel"),
            vmem_limit_bytes=vmem_limit,
        ),
        cost_estimate=pl.CostEstimate(
            flops=B * C * HW,
            transcendentals=0,
            bytes_accessed=2 * B * C * HW * itemsize + B * C * 4),
        **extra,
    )(x_flat, attn)
    return out_flat


def channel_attention(x_nchw, w1, w2, *, mode="auto", donate_x=False, tile_hw=None):
    """CBAM channel attention.  x_nchw: (B, C, H, W); w1: (C//r, C); w2: (C, C//r)."""
    B, C, H, W = x_nchw.shape
    Cr = w1.shape[0]
    assert w1.shape == (Cr, C) and w2.shape == (C, Cr)

    HW = H * W
    itemsize = jnp.dtype(x_nchw.dtype).itemsize
    x_flat = x_nchw.reshape(B, C, HW)                  # no HBM pad / slice passes

    # Generation-aware VMEM budgets: ~96 MiB limit / ~16 MiB fused slabs on
    # 128-MiB parts (v5e/v6e), ~48 MiB / ~8 MiB on v7x (64 MiB per TC).
    vmem_cap = _vmem_capacity_bytes()
    vmem_limit = min(100 << 20, vmem_cap * 3 // 4)

    slab_bytes = C * HW * itemsize
    # Fused-path working set: double-buffered in + out slabs, plus one f32
    # temporary for the sum-reduction upcast when the input is sub-32-bit.
    f32_temp = 0 if itemsize >= 4 else C * HW * 4
    fused_need = 4 * slab_bytes + f32_temp + (w1.size + w2.size) * 4

    if mode == "auto":
        mode = "fused" if fused_need <= int(vmem_limit * 0.7) else "tiled"

    if mode == "fused":
        out_flat = _channel_attention_fused(
            x_flat, w1, w2, vmem_limit=vmem_limit, donate_x=donate_x)
    else:
        out_flat = _channel_attention_tiled(
            x_flat, w1, w2, vmem_limit=vmem_limit, donate_x=donate_x,
            tile_hw=tile_hw)

    return out_flat.reshape(B, C, H, W)


def channel_attention_ref(x, w1, w2):
    """Pure-JAX reference matching the PyTorch module."""
    xf = x.astype(jnp.float32)
    avg = jnp.mean(xf, axis=(2, 3))                    # (B, C)
    mx = jnp.max(xf, axis=(2, 3))                      # (B, C)

    def mlp(p):                                        # p: (B, C)
        h = jnp.maximum(p @ w1.T, 0.0)                 # (B, Cr)
        return h @ w2.T                                # (B, C)

    attn = jax.nn.sigmoid(mlp(avg) + mlp(mx))          # (B, C)
    return (xf * attn[:, :, None, None]).astype(x.dtype)


if __name__ == "__main__":
    key = jax.random.PRNGKey(0)

    # Case 1: fused single-pass path, lane-aligned HW (16*16 = 256).
    B, C, H, W, red = 2, 32, 16, 16, 16
    Cr = C // red
    k1, k2, k3, key = jax.random.split(key, 4)
    x = jax.random.normal(k1, (B, C, H, W), dtype=jnp.float32)
    w1 = jax.random.normal(k2, (Cr, C), dtype=jnp.float32) * 0.1   # Conv2d(C,Cr,1) weight
    w2 = jax.random.normal(k3, (C, Cr), dtype=jnp.float32) * 0.1   # Conv2d(Cr,C,1) weight
    out = jax.block_until_ready(channel_attention(x, w1, w2))
    ref = channel_attention_ref(x, w1, w2)
    assert out.shape == x.shape
    assert jnp.allclose(out, ref, atol=1e-5, rtol=1e-5), "fused (aligned) mismatch"

    # Case 2: fused path with unaligned HW (10*13 = 130) — full-dim block,
    # no HBM pad/slice, Mosaic masks the reductions internally.
    B, C, H, W, red = 2, 32, 10, 13, 8
    Cr = C // red
    k1, k2, k3, key = jax.random.split(key, 4)
    x = jax.random.normal(k1, (B, C, H, W), dtype=jnp.float32)
    w1 = jax.random.normal(k2, (Cr, C), dtype=jnp.float32) * 0.1
    w2 = jax.random.normal(k3, (C, Cr), dtype=jnp.float32) * 0.1
    out = jax.block_until_ready(channel_attention(x, w1, w2))
    ref = channel_attention_ref(x, w1, w2)
    assert out.shape == x.shape
    assert jnp.allclose(out, ref, atol=1e-5, rtol=1e-5), "fused (unaligned) mismatch"

    # Case 3: forced tiled two-pass path with a partial remainder tile
    # (HW = 18*20 = 360, tile 128 -> 3 tiles, last tile 104 valid lanes).
    B, C, H, W, red = 2, 32, 18, 20, 8
    Cr = C // red
    k1, k2, k3, key = jax.random.split(key, 4)
    x = jax.random.normal(k1, (B, C, H, W), dtype=jnp.float32)
    w1 = jax.random.normal(k2, (Cr, C), dtype=jnp.float32) * 0.1
    w2 = jax.random.normal(k3, (C, Cr), dtype=jnp.float32) * 0.1
    out = jax.block_until_ready(
        channel_attention(x, w1, w2, mode="tiled", tile_hw=128))
    ref = channel_attention_ref(x, w1, w2)
    assert out.shape == x.shape
    assert jnp.allclose(out, ref, atol=1e-5, rtol=1e-5), "tiled path mismatch"

    print("KERNEL_OK")
</pallas_src>

<mosaic_0001>
module attributes {stable_mosaic.version = 11 : i64} {
  func.func @_fused_kernel(%arg0: i32, %arg1: memref<1x32x256xf32, #tpu.memory_space<vmem>>, %arg2: memref<2x32xf32, #tpu.memory_space<vmem>>, %arg3: memref<32x2xf32, #tpu.memory_space<vmem>>, %arg4: memref<1x32x256xf32, #tpu.memory_space<vmem>>) attributes {dimension_semantics = [#tpu.dimension_semantics<parallel>], iteration_bounds = array<i64: 2>, scalar_prefetch = 0 : i64, scratch_operands = 0 : i64, tpu.core_type = #tpu.core_type<tc>, window_params = [{transform_indices = @transform_0, window_bounds = array<i64: 1, 32, 256>}, {pipeline_mode = #tpu.pipeline_mode<synchronous>, transform_indices = @transform_1, window_bounds = array<i64: 2, 32>}, {pipeline_mode = #tpu.pipeline_mode<synchronous>, transform_indices = @transform_2, window_bounds = array<i64: 32, 2>}, {transform_indices = @transform_3, window_bounds = array<i64: 1, 32, 256>}]} {
    %c0 = arith.constant 0 : index
    %c0_0 = arith.constant 0 : index
    %c0_1 = arith.constant 0 : index
    %0 = vector.load %arg1[%c0, %c0_0, %c0_1] : memref<1x32x256xf32, #tpu.memory_space<vmem>>, vector<1x32x256xf32>
    %cst = arith.constant dense<0.000000e+00> : vector<1x32xf32>
    %1 = vector.multi_reduction <add>, %0, %cst [2] : vector<1x32x256xf32> to vector<1x32xf32>
    %2 = vector.shape_cast %1 : vector<1x32xf32> to vector<1x32x1xf32>
    %cst_2 = arith.constant 3.906250e-03 : f32
    %3 = vector.broadcast %cst_2 : f32 to vector<1x32x1xf32>
    %4 = arith.mulf %2, %3 : vector<1x32x1xf32>
    %cst_3 = arith.constant dense<0xFF800000> : vector<1x32xf32>
    %5 = vector.multi_reduction <maximumf>, %0, %cst_3 [2] : vector<1x32x256xf32> to vector<1x32xf32>
    %6 = vector.shape_cast %5 : vector<1x32xf32> to vector<1x32x1xf32>
    %c0_4 = arith.constant 0 : index
    %c0_5 = arith.constant 0 : index
    %7 = vector.load %arg2[%c0_4, %c0_5] : memref<2x32xf32, #tpu.memory_space<vmem>>, vector<2x32xf32>
    %c0_6 = arith.constant 0 : index
    %c0_7 = arith.constant 0 : index
    %8 = vector.load %arg3[%c0_6, %c0_7] : memref<32x2xf32, #tpu.memory_space<vmem>>, vector<32x2xf32>
    %9 = vector.shape_cast %4 : vector<1x32x1xf32> to vector<32x1xf32>
    %cst_8 = arith.constant dense<0.000000e+00> : vector<2x1xf32>
    %10 = tpu.matmul %7, %9, %cst_8 {dimension_numbers = #tpu.dot_dimension_numbers<[1], [0], [0], [1], [0, 0, 1, 1], [], []>} : vector<2x32xf32>, vector<32x1xf32>, vector<2x1xf32> -> vector<2x1xf32>
    %cst_9 = arith.constant 0.000000e+00 : f32
    %11 = vector.broadcast %cst_9 : f32 to vector<2x1xf32>
    %12 = arith.maximumf %10, %11 : vector<2x1xf32>
    %13 = vector.shape_cast %6 : vector<1x32x1xf32> to vector<32x1xf32>
    %cst_10 = arith.constant dense<0.000000e+00> : vector<2x1xf32>
    %14 = tpu.matmul %7, %13, %cst_10 {dimension_numbers = #tpu.dot_dimension_numbers<[1], [0], [0], [1], [0, 0, 1, 1], [], []>} : vector<2x32xf32>, vector<32x1xf32>, vector<2x1xf32> -> vector<2x1xf32>
    %cst_11 = arith.constant 0.000000e+00 : f32
    %15 = vector.broadcast %cst_11 : f32 to vector<2x1xf32>
    %16 = arith.maximumf %14, %15 : vector<2x1xf32>
    %17 = arith.addf %12, %16 : vector<2x1xf32>
    %cst_12 = arith.constant dense<0.000000e+00> : vector<32x1xf32>
    %18 = tpu.matmul %8, %17, %cst_12 {dimension_numbers = #tpu.dot_dimension_numbers<[1], [0], [0], [1], [0, 0, 1, 1], [], []>} : vector<32x2xf32>, vector<2x1xf32>, vector<32x1xf32> -> vector<32x1xf32>
    %19 = arith.negf %18 : vector<32x1xf32>
    %20 = math.exp %19 : vector<32x1xf32>
    %cst_13 = arith.constant 1.000000e+00 : f32
    %21 = vector.broadcast %cst_13 : f32 to vector<32x1xf32>
    %22 = arith.addf %21, %20 : vector<32x1xf32>
    %23 = arith.divf %21, %22 : vector<32x1xf32>
    %24 = vector.shape_cast %23 : vector<32x1xf32> to vector<1x32x1xf32>
    %25 = vector.broadcast %24 : vector<1x32x1xf32> to vector<1x32x256xf32>
    %26 = arith.mulf %0, %25 : vector<1x32x256xf32>
    %c0_14 = arith.constant 0 : index
    %c0_15 = arith.constant 0 : index
    %c0_16 = arith.constant 0 : index
    %27 = vector.load %arg4[%c0_14, %c0_15, %c0_16] : memref<1x32x256xf32, #tpu.memory_space<vmem>>, vector<1x32x256xf32>
    tpu.vector_store %arg4[%c0_14, %c0_15, %c0_16], %26 {strides = array<i32>} : memref<1x32x256xf32, #tpu.memory_space<vmem>>, vector<1x32x256xf32>,
    return
  }
  func.func @transform_0(%arg0: i32) -> (i32, i32, i32) {
    %c0_i32 = arith.constant 0 : i32
    %c0_i32_0 = arith.constant 0 : i32
    %c0_i32_1 = arith.constant 0 : i32
    return %arg0, %c0_i32, %c0_i32_0 : i32, i32, i32
  }
  func.func @transform_1(%arg0: i32) -> (i32, i32) {
    %c0_i32 = arith.constant 0 : i32
    %c0_i32_0 = arith.constant 0 : i32
    %c0_i32_1 = arith.constant 0 : i32
    return %c0_i32, %c0_i32_0 : i32, i32
  }
  func.func @transform_2(%arg0: i32) -> (i32, i32) {
    %c0_i32 = arith.constant 0 : i32
    %c0_i32_0 = arith.constant 0 : i32
    %c0_i32_1 = arith.constant 0 : i32
    return %c0_i32, %c0_i32_0 : i32, i32
  }
  func.func @transform_3(%arg0: i32) -> (i32, i32, i32) {
    %c0_i32 = arith.constant 0 : i32
    %c0_i32_0 = arith.constant 0 : i32
    %c0_i32_1 = arith.constant 0 : i32
    return %arg0, %c0_i32, %c0_i32_0 : i32, i32, i32
  }
}

</mosaic_0001>

<llo_original>
// kernel: tpu_custom_call.1
$region0: #{tpu_custom_call.1}
  #allocation0 [shape = 'u32[]', space=smem, size = 0x4, offset = 0x4, fixed_abs, tag = 'smem constant byte address 0x4 - core index']
  #allocation1 [shape = 'u32[72,128]{1,0:T(1,128)}', space=vmem, size = 0x9000, scoped, tag = 'internal scratch']
  %s0 = inlined_call_operand.hbm [shape: f32[2,32,256], index: 0, kind: input, shape index: {}]
  %s1 = inlined_call_operand.vmem [shape: f32[2,32], index: 1, kind: input, shape index: {}]
  %s2 = inlined_call_operand.vmem [shape: f32[32,2], index: 2, kind: input, shape index: {}]
  %s3 = inlined_call_operand.hbm [shape: f32[2,32,256], index: 3, kind: output, shape index: {}]
  %s4 = sld [smem:[#allocation0]]
  $region49: #{tpu_custom_call.1} parent=0
    _
  %s6 = ssub.s32 1, %s4
  %s7 = scalar_select 0, %s6, %s4
  $region1: #{tpu_custom_call.1} parent=0
    #allocation2 [shape = 'u8[65536]{0}', space=vmem, size = 0x10000, scoped, tag = 'input window, operand 0']
    #allocation3 [shape = 's32[2]{0}', space=sflag, size = 0x8, scoped, tag = 'scoped memory for tpu_custom_call.1']
    #allocation4 [shape = 's32[2]{0}', space=sflag, size = 0x8, scoped, tag = 'scoped memory for tpu_custom_call.1']
    #allocation5 [shape = 'u8[65536]{0}', space=vmem, size = 0x10000, scoped, tag = 'output window, operand 0']
    %8 = vsyncpa [#allocation3], 0
    %s9 = scalar_lea.sflag [#allocation3], 1
    %10 = vsyncpa %s9, 0
    %11 = vsyncpa [#allocation4], 0
    %s12 = scalar_lea.sflag [#allocation4], 1
    %13 = vsyncpa %s12, 0
    loop: start=0, step=1, limit=4
    $region2: #{tpu_custom_call.1} parent=1 // loop_pre_header
      _
    $region3: #{tpu_custom_call.1} parent=1 // loop_header
      %s15 = sphi 0, %s19
      %p16 = scmp.ge.s32.totalorder %s15, 4
      %s25 = sphi 0, %s27
      %s28 = sphi 0, %s25
      %s29 = sphi 0, %s28
      %s45 = sphi 0, %s29
      %s49 = sphi 0, %s49
      %s51 = sphi 0, %s49
      %s52 = sphi 0, %s51
      %s66 = sphi 0, %s52
      %s70 = sphi 0, %s70
      %s72 = sphi 0, %s70
      %s73 = sphi 0, %s72
      %s87 = sphi 0, %s73
      %s93 = sphi 0, %s95
      %s96 = sphi 0, %s93
      %s97 = sphi 0, %s96
      %s113 = sphi 0, %s97
    $region4: #{tpu_custom_call.1} parent=1 // loop_header_branch
      %18 = sbr.rel (%p16) target = $region8
    $region5: #{tpu_custom_call.1} parent=1 // loop_body
      %s20 = ssub.s32 %s15, 1
      %s21 = ssub.s32 %s15, 2
      %s22 = sadd.s32 %s15, 1
      %s23 = ssub.s32 %s15, %s22
      %p24 = scmp.eq.s32.totalorder %s23, 0
      %s26 = sadd.s32 %s25, 1
      %s27 = scalar_select %p24, %s25, %s26
      %p30 = pneg %p24
      %p31 = scmp.eq.s32.totalorder %s15, 1
      %p32 = por %p30, %p31
      %p33 = scmp.ne.s32.totalorder %s25, %s28
      %p34 = scmp.eq.s32.totalorder %s15, 0
      %p35 = por %p33, %p34
      %p36 = scmp.ne.s32.totalorder %s25, %s28
      %p37 = scmp.eq.s32.totalorder %s20, 1
      %p38 = por %p36, %p37
      %p39 = scmp.ne.s32.totalorder %s28, %s29
      %p40 = scmp.eq.s32.totalorder %s20, 0
      %p41 = por %p39, %p40
      %p42 = scmp.ne.s32.totalorder %s28, %s29
      %p43 = scmp.eq.s32.totalorder %s21, 1
      %p44 = por %p42, %p43
      %p46 = scmp.ne.s32.totalorder %s29, %s45
      %p47 = scmp.eq.s32.totalorder %s21, 0
      %p48 = por %p46, %p47
      %s50 = sadd.s32 %s49, 1
      %p53 = scmp.eq.s32.totalorder %s15, 1
      %p54 = scmp.ne.s32.totalorder %s49, %s51
      %p55 = scmp.eq.s32.totalorder %s15, 0
      %p56 = por %p54, %p55
      %p57 = scmp.ne.s32.totalorder %s49, %s51
      %p58 = scmp.eq.s32.totalorder %s20, 1
      %p59 = por %p57, %p58
      %p60 = scmp.ne.s32.totalorder %s51, %s52
      %p61 = scmp.eq.s32.totalorder %s20, 0
      %p62 = por %p60, %p61
      %p63 = scmp.ne.s32.totalorder %s51, %s52
      %p64 = scmp.eq.s32.totalorder %s21, 1
      %p65 = por %p63, %p64
      %p67 = scmp.ne.s32.totalorder %s52, %s66
      %p68 = scmp.eq.s32.totalorder %s21, 0
      %p69 = por %p67, %p68
      %s71 = sadd.s32 %s70, 1
      %p74 = scmp.eq.s32.totalorder %s15, 1
      %p75 = scmp.ne.s32.totalorder %s70, %s72
      %p76 = scmp.eq.s32.totalorder %s15, 0
      %p77 = por %p75, %p76
      %p78 = scmp.ne.s32.totalorder %s70, %s72
      %p79 = scmp.eq.s32.totalorder %s20, 1
      %p80 = por %p78, %p79
      %p81 = scmp.ne.s32.totalorder %s72, %s73
      %p82 = scmp.eq.s32.totalorder %s20, 0
      %p83 = por %p81, %p82
      %p84 = scmp.ne.s32.totalorder %s72, %s73
      %p85 = scmp.eq.s32.totalorder %s21, 1
      %p86 = por %p84, %p85
      %p88 = scmp.ne.s32.totalorder %s73, %s87
      %p89 = scmp.eq.s32.totalorder %s21, 0
      %p90 = por %p88, %p89
      %s91 = ssub.s32 %s15, %s22
      %p92 = scmp.eq.s32.totalorder %s91, 0
      %s94 = sadd.s32 %s93, 1
      %s95 = scalar_select %p92, %s93, %s94
      %p98 = pneg %p92
      %p99 = scmp.eq.s32.totalorder %s15, 1
      %p100 = por %p98, %p99
      %p101 = scmp.ne.s32.totalorder %s93, %s96
      %p102 = scmp.eq.s32.totalorder %s15, 0
      %p103 = por %p101, %p102
      %p104 = scmp.ne.s32.totalorder %s93, %s96
      %p105 = scmp.eq.s32.totalorder %s20, 1
      %p106 = por %p104, %p105
      %p107 = scmp.ne.s32.totalorder %s96, %s97
      %p108 = scmp.eq.s32.totalorder %s20, 0
      %p109 = por %p107, %p108
      %p110 = scmp.ne.s32.totalorder %s96, %s97
      %p111 = scmp.eq.s32.totalorder %s21, 1
      %p112 = por %p110, %p111
      %p114 = scmp.ne.s32.totalorder %s97, %s113
      %p115 = scmp.eq.s32.totalorder %s21, 0
      %p116 = por %p114, %p115
      %p117 = scmp.le.s32.totalorder 1, %s15
      %p118 = scmp.lt.s32.totalorder %s15, 3
      %p119 = pnand %p117, %p118
      %p120 = pneg %p119
      // Predicated region
      $region9: #{tpu_custom_call.1} parent=5 // pred_check
        _
      $region10: #{tpu_custom_call.1} parent=5 // pred_check_branch
        %122 = sbr.rel (%p119) target = $region12
      $region11: #{tpu_custom_call.1} parent=5 // pred_region
        %s123 = ssub.s32 %s15, 1
        // Predicated region
        $region13: #{tpu_custom_call.1} parent=11 // pred_check
          %p124 = pneg %p62
        $region14: #{tpu_custom_call.1} parent=11 // pred_check_branch
          %126 = sbr.rel (%p124) target = $region16
        $region15: #{tpu_custom_call.1} parent=11 // pred_region
          _
        $region16: #{tpu_custom_call.1} parent=11 // pred_fallthru
          _
        // Predicated region
        $region17: #{tpu_custom_call.1} parent=11 // pred_check
          %p127 = pneg %p83
        $region18: #{tpu_custom_call.1} parent=11 // pred_check_branch
          %129 = sbr.rel (%p127) target = $region20
        $region19: #{tpu_custom_call.1} parent=11 // pred_region
          _
        $region20: #{tpu_custom_call.1} parent=11 // pred_fallthru
          _
      $region12: #{tpu_custom_call.1} parent=5 // pred_fallthru
        _
      %p130 = scmp.lt.s32.totalorder %s15, 2
      // Predicated region
      $region21: #{tpu_custom_call.1} parent=5 // pred_check
        %p131 = pneg %p130
      $region22: #{tpu_custom_call.1} parent=5 // pred_check_branch
        %133 = sbr.rel (%p131) target = $region24
      $region23: #{tpu_custom_call.1} parent=5 // pred_region
        // Predicated region
        $region25: #{tpu_custom_call.1} parent=23 // pred_check
          %p134 = pneg %p35
        $region26: #{tpu_custom_call.1} parent=23 // pred_check_branch
          %136 = sbr.rel (%p134) target = $region28
        $region27: #{tpu_custom_call.1} parent=23 // pred_region
          %s137 = sand.u32 %s25, 1
          %s138 = scalar_lea.sflag [#allocation3], %s137
          %s139 = sand.u32 %s25, 1
          %s140 = smul.addr %s139, 64
          %s141 = scalar_lea.vmem [#allocation2], %s140
          %143 = vsyncadd %s138, 0
          %s144 = smul.addr %s15, 8
          %s145 = smul.addr %s144, 8
          %s146 = scalar_lea.hbm %s0, %s145
          %s147 = sshll.u32 %s146, 4
          %s148 = int_to_ptr.hbm [resolvable:$true] %s147
          %s149 = sshll.u32 %s141, 4
          %s150 = int_to_ptr.vmem [resolvable:$true] %s149
          %155 = dma.hbm_to_vmem [thread:$0]  %s148, 1024, %s150, %s138, 256, 256, 16
        $region28: #{tpu_custom_call.1} parent=23 // pred_fallthru
          _
      $region24: #{tpu_custom_call.1} parent=5 // pred_fallthru
        _
      %p156 = scmp.le.s32.totalorder 1, %s15
      %p157 = scmp.lt.s32.totalorder %s15, 3
      %p158 = pnand %p156, %p157
      %p159 = pneg %p158
      // Predicated region
      $region29: #{tpu_custom_call.1} parent=5 // pred_check
        _
      $region30: #{tpu_custom_call.1} parent=5 // pred_check_branch
        %161 = sbr.rel (%p158) target = $region32
      $region31: #{tpu_custom_call.1} parent=5 // pred_region
        %s162 = ssub.s32 %s15, 1
        %s163 = sand.u32 %s28, 1
        %s164 = scalar_lea.sflag [#allocation3], %s163
        %s165 = sand.u32 %s28, 1
        %s166 = smul.addr %s165, 64
        %s167 = scalar_lea.vmem [#allocation2], %s166
        // Predicated region
        $region33: #{tpu_custom_call.1} parent=31 // pred_check
          %p168 = pneg %p41
        $region34: #{tpu_custom_call.1} parent=31 // pred_check_branch
          %170 = sbr.rel (%p168) target = $region36
        $region35: #{tpu_custom_call.1} parent=31 // pred_region
          %172 = dma.done %s164, 1024
        $region36: #{tpu_custom_call.1} parent=31 // pred_fallthru
          _
        %s173 = sand.u32 %s28, 1
        %s174 = scalar_lea.sflag [#allocation3], %s173
        %s175 = sand.u32 %s28, 1
        %s176 = smul.addr %s175, 64
        %s177 = scalar_lea.vmem [#allocation2], %s176
        %p178 = pneg %p41
        %p179 = pneg %p38
        %p180 = pneg %p62
        %p181 = pneg %p59
        %p182 = pneg %p83
        %p183 = pneg %p80
        %p184 = pneg %p109
        %p185 = pneg %p106
        %s186 = sand.u32 %s96, 1
        %s187 = scalar_lea.sflag [#allocation4], %s186
        %s188 = sand.u32 %s96, 1
        %s189 = smul.addr %s188, 64
        %s190 = scalar_lea.vmem [#allocation5], %s189
        %v191 = vld [vmem:[%s167] sm:$0xff]
        %v192 = vld [vmem:[%s167 + $0x8] sm:$0xff]
        %v193 = vld [vmem:[%s167 + $0x10] sm:$0xff]
        %v194 = vld [vmem:[%s167 + $0x18] sm:$0xff]
        %v195 = vld [vmem:[%s167 + $0x20] sm:$0xff]
        %v196 = vld [vmem:[%s167 + $0x28] sm:$0xff]
        %v197 = vld [vmem:[%s167 + $0x30] sm:$0xff]
        %v198 = vld [vmem:[%s167 + $0x38] sm:$0xff]
        %v199 = vadd.f32 %v191, %v192
        %200 = vadd.xlane.f32.xlu0 %v199
        %v201 = vpop.xlane.xlu0 %200
        %v202 = vadd.f32 %v193, %v194
        %203 = vadd.xlane.f32.xlu0 %v202
        %v204 = vpop.xlane.xlu0 %203
        %v205 = vadd.f32 %v195, %v196
        %206 = vadd.xlane.f32.xlu0 %v205
        %v207 = vpop.xlane.xlu0 %206
        %v208 = vadd.f32 %v197, %v198
        %209 = vadd.xlane.f32.xlu0 %v208
        %v210 = vpop.xlane.xlu0 %209
        %v211 = vmul.f32 %v201, 0.00390625
        %v212 = vmul.f32 %v204, 0.00390625
        %v213 = vmul.f32 %v207, 0.00390625
        %v214 = vmul.f32 %v210, 0.00390625
        %v215 = vmax.f32 %v191, %v192
        %216 = vmax.xlane.f32.xlu0 %v215
        %v217 = vpop.xlane.xlu0 %216
        %v218 = vmax.f32 %v193, %v194
        %219 = vmax.xlane.f32.xlu0 %v218
        %v220 = vpop.xlane.xlu0 %219
        %v221 = vmax.f32 %v195, %v196
        %222 = vmax.xlane.f32.xlu0 %v221
        %v223 = vpop.xlane.xlu0 %222
        %v224 = vmax.f32 %v197, %v198
        %225 = vmax.xlane.f32.xlu0 %v224
        %v226 = vpop.xlane.xlu0 %225
        %v227 = vld [vmem:[%s1] sm:$0x3]
        %v228 = vld [vmem:[%s2] sm:$0xff]
        %v229 = vld [vmem:[%s2 + $0x8] sm:$0xff]
        %v230 = vld [vmem:[%s2 + $0x10] sm:$0xff]
        %v231 = vld [vmem:[%s2 + $0x18] sm:$0xff]
        %vm232 = vcmask 261120
        %v234 = vsel %vm232, %v227, 0
        %236 = vmatpush.msra.mxu0 0.0
        %237 = vmatpush.msra.mxu0 0.0
        %238 = vmatpush.msra.mxu0 0.0
        %239 = vmatpush.msra.mxu0 0.0
        %240 = vmatpush.msra.mxu0 0.0
        %241 = vmatpush.msra.mxu0 0.0
        %242 = vmatpush.msra.mxu0 0.0
        %243 = vmatpush.msra.mxu0 0.0
        %244 = vmatpush.msra.mxu0 0.0
        %245 = vmatpush.msra.mxu0 0.0
        %246 = vmatpush.msra.mxu0 0.0
        %247 = vmatpush.msra.mxu0 0.0
        %248 = vmatpush.msra.mxu0 %v214
        %249 = vmatpush.msra.mxu0 %v213
        %250 = vmatpush.msra.mxu0 %v212
        %251 = vmatpush.msra.mxu0 %v211
        %252 = vmatmul.f32.gmra.mxu0 %v234
        %v253 = vpop.f32.mrf.mxu0
        %v254 = vadd.f32 0.0, %v253
        %255 = vdwg.mxu0
        %v256 = vmax.f32 %v254, 0.0
        %257 = vmatpush.msra.mxu0 0.0
        %258 = vmatpush.msra.mxu0 0.0
        %259 = vmatpush.msra.mxu0 0.0
        %260 = vmatpush.msra.mxu0 0.0
        %261 = vmatpush.msra.mxu0 0.0
        %262 = vmatpush.msra.mxu0 0.0
        %263 = vmatpush.msra.mxu0 0.0
        %264 = vmatpush.msra.mxu0 0.0
        %265 = vmatpush.msra.mxu0 0.0
        %266 = vmatpush.msra.mxu0 0.0
        %267 = vmatpush.msra.mxu0 0.0
        %268 = vmatpush.msra.mxu0 0.0
        %269 = vmatpush.msra.mxu0 %v226
        %270 = vmatpush.msra.mxu0 %v223
        %271 = vmatpush.msra.mxu0 %v220
        %272 = vmatpush.msra.mxu0 %v217
        %273 = vmatmul.f32.gmra.mxu0 %v234
        %v274 = vpop.f32.mrf.mxu0
        %v275 = vadd.f32 0.0, %v274
        %276 = vdwg.mxu0
        %v277 = vmax.f32 %v275, 0.0
        %v278 = vadd.f32 %v256, %v277
        %vm279 = vcmask 15360
        %v281 = vsel %vm279, %v228, 0
        %v284 = vsel %vm279, %v229, 0
        %v287 = vsel %vm279, %v230, 0
        %v290 = vsel %vm279, %v231, 0
        %vm292 = vcmask 1041408
        %v294 = vsel %vm292, %v278, 0
        %296 = vmatpush.msra.mxu0 0.0
        %297 = vmatpush.msra.mxu0 0.0
        %298 = vmatpush.msra.mxu0 0.0
        %299 = vmatpush.msra.mxu0 0.0
        %300 = vmatpush.msra.mxu0 0.0
        %301 = vmatpush.msra.mxu0 0.0
        %302 = vmatpush.msra.mxu0 0.0
        %303 = vmatpush.msra.mxu0 0.0
        %304 = vmatpush.msra.mxu0 0.0
        %305 = vmatpush.msra.mxu0 0.0
        %306 = vmatpush.msra.mxu0 0.0
        %307 = vmatpush.msra.mxu0 0.0
        %308 = vmatpush.msra.mxu0 0.0
        %309 = vmatpush.msra.mxu0 0.0
        %310 = vmatpush.msra.mxu0 0.0
        %311 = vmatpush.msra.mxu0 %v294
        %312 = vmatmul.f32.gmra.mxu0 %v281
        %v313 = vpop.f32.mrf.mxu0
        %v314 = vadd.f32 0.0, %v313
        %315 = vmatmul.f32.gmra.mxu0 %v284
        %v316 = vpop.f32.mrf.mxu0
        %v317 = vadd.f32 0.0, %v316
        %318 = vmatmul.f32.gmra.mxu0 %v287
        %v319 = vpop.f32.mrf.mxu0
        %v320 = vadd.f32 0.0, %v319
        %321 = vmatmul.f32.gmra.mxu0 %v290
        %v322 = vpop.f32.mrf.mxu0
        %v323 = vadd.f32 0.0, %v322
        %324 = vdwg.mxu0
        %v325 = vxor.u32 %v314, 2147483648
        %v326 = vxor.u32 %v317, 2147483648
        %v327 = vxor.u32 %v320, 2147483648
        %v328 = vxor.u32 %v323, 2147483648
        %v329 = vmul.f32 %v325, 1.442695
        %v330 = vpow.pop %v329
        %v331 = vmul.f32 %v326, 1.442695
        %v332 = vpow.pop %v331
        %v333 = vmul.f32 %v327, 1.442695
        %v334 = vpow.pop %v333
        %v335 = vmul.f32 %v328, 1.442695
        %v336 = vpow.pop %v335
        %v337 = vadd.f32 %v330, 1.0
        %v338 = vadd.f32 %v332, 1.0
        %v339 = vadd.f32 %v334, 1.0
        %v340 = vadd.f32 %v336, 1.0
        %v341 = vrcp.pop %v337
        %v342 = vmul.f32 %v337, %v341
        %v343 = vsub.f32 1.0, %v342
        %v344 = vmul.f32 %v341, %v343
        %v345 = vadd.f32 %v341, %v344
        %vm346 = vweird.f32 %v337
        %vm347 = vweird.f32 %v341
        %vm348 = vmor %vm346, %vm347
        %v349 = vsel %vm348, %v341, %v345
        %v350 = vand.u32 2147483647, %v337
        %vm351 = vcmp.eq.f32.partialorder %v350, 8.507059e+37
        %v352 = vand.u32 %v337, 2147483648
        %v353 = vor.u32 1.1754944e-38, %v352
        %v354 = vsel %vm351, %v353, %v349
        %v355 = vmul.f32 1.0, %v354
        %v356 = vrcp.pop %v338
        %v357 = vmul.f32 %v338, %v356
        %v358 = vsub.f32 1.0, %v357
        %v359 = vmul.f32 %v356, %v358
        %v360 = vadd.f32 %v356, %v359
        %vm361 = vweird.f32 %v338
        %vm362 = vweird.f32 %v356
        %vm363 = vmor %vm361, %vm362
        %v364 = vsel %vm363, %v356, %v360
        %v365 = vand.u32 2147483647, %v338
        %vm366 = vcmp.eq.f32.partialorder %v365, 8.507059e+37
        %v367 = vand.u32 %v338, 2147483648
        %v368 = vor.u32 1.1754944e-38, %v367
        %v369 = vsel %vm366, %v368, %v364
        %v370 = vmul.f32 1.0, %v369
        %v371 = vrcp.pop %v339
        %v372 = vmul.f32 %v339, %v371
        %v373 = vsub.f32 1.0, %v372
        %v374 = vmul.f32 %v371, %v373
        %v375 = vadd.f32 %v371, %v374
        %vm376 = vweird.f32 %v339
        %vm377 = vweird.f32 %v371
        %vm378 = vmor %vm376, %vm377
        %v379 = vsel %vm378, %v371, %v375
        %v380 = vand.u32 2147483647, %v339
        %vm381 = vcmp.eq.f32.partialorder %v380, 8.507059e+37
        %v382 = vand.u32 %v339, 2147483648
        %v383 = vor.u32 1.1754944e-38, %v382
        %v384 = vsel %vm381, %v383, %v379
        %v385 = vmul.f32 1.0, %v384
        %v386 = vrcp.pop %v340
        %v387 = vmul.f32 %v340, %v386
        %v388 = vsub.f32 1.0, %v387
        %v389 = vmul.f32 %v386, %v388
        %v390 = vadd.f32 %v386, %v389
        %vm391 = vweird.f32 %v340
        %vm392 = vweird.f32 %v386
        %vm393 = vmor %vm391, %vm392
        %v394 = vsel %vm393, %v386, %v390
        %v395 = vand.u32 2147483647, %v340
        %vm396 = vcmp.eq.f32.partialorder %v395, 8.507059e+37
        %v397 = vand.u32 %v340, 2147483648
        %v398 = vor.u32 1.1754944e-38, %v397
        %v399 = vsel %vm396, %v398, %v394
        %v400 = vmul.f32 1.0, %v399
        %402 = vset.pattern.permute.xlu0 0
        %403 = vperm.xlu0 %402, %v355
        %v404 = vpop.permute.xlu0 %403
        %407 = vset.pattern.permute.xlu0 0
        %408 = vperm.xlu0 %407, %v370
        %v409 = vpop.permute.xlu0 %408
        %412 = vset.pattern.permute.xlu0 0
        %413 = vperm.xlu0 %412, %v385
        %v414 = vpop.permute.xlu0 %413
        %417 = vset.pattern.permute.xlu0 0
        %418 = vperm.xlu0 %417, %v400
        %v419 = vpop.permute.xlu0 %418
        %v421 = vmul.f32 %v191, %v404
        %v422 = vmul.f32 %v192, %v404
        %v423 = vmul.f32 %v193, %v409
        %v424 = vmul.f32 %v194, %v409
        %v425 = vmul.f32 %v195, %v414
        %v426 = vmul.f32 %v196, %v414
        %v427 = vmul.f32 %v197, %v419
        %v428 = vmul.f32 %v198, %v419
        %429 = vst [vmem:[%s190] sm:$0xff] %v421
        %430 = vst [vmem:[%s190 + $0x8] sm:$0xff] %v422
        %431 = vst [vmem:[%s190 + $0x10] sm:$0xff] %v423
        %432 = vst [vmem:[%s190 + $0x18] sm:$0xff] %v424
        %433 = vst [vmem:[%s190 + $0x20] sm:$0xff] %v425
        %434 = vst [vmem:[%s190 + $0x28] sm:$0xff] %v426
        %435 = vst [vmem:[%s190 + $0x30] sm:$0xff] %v427
        %436 = vst [vmem:[%s190 + $0x38] sm:$0xff] %v428
        %s437 = sand.u32 %s96, 1
        %s438 = scalar_lea.sflag [#allocation4], %s437
        %s439 = sand.u32 %s96, 1
        %s440 = smul.addr %s439, 64
        %s441 = scalar_lea.vmem [#allocation5], %s440
        // Predicated region
        $region37: #{tpu_custom_call.1} parent=31 // pred_check
          %p442 = pneg %p106
        $region38: #{tpu_custom_call.1} parent=31 // pred_check_branch
          %444 = sbr.rel (%p442) target = $region40
        $region39: #{tpu_custom_call.1} parent=31 // pred_region
          %446 = vsyncadd %s438, 0
          %s447 = smul.addr %s20, 8
          %s448 = smul.addr %s447, 8
          %s449 = scalar_lea.hbm %s3, %s448
          %s450 = sshll.u32 %s441, 4
          %s451 = int_to_ptr.vmem [resolvable:$true] %s450
          %s452 = sshll.u32 %s449, 4
          %s453 = int_to_ptr.hbm [resolvable:$true] %s452
          %458 = dma.vmem_to_hbm [thread:$0]  %s451, 1024, %s453, %s438, 256, 256, 16
        $region40: #{tpu_custom_call.1} parent=31 // pred_fallthru
          _
      $region32: #{tpu_custom_call.1} parent=5 // pred_fallthru
        _
      %p459 = scmp.le.s32.totalorder 2, %s15
      // Predicated region
      $region41: #{tpu_custom_call.1} parent=5 // pred_check
        %p460 = pneg %p459
      $region42: #{tpu_custom_call.1} parent=5 // pred_check_branch
        %462 = sbr.rel (%p460) target = $region44
      $region43: #{tpu_custom_call.1} parent=5 // pred_region
        %s463 = ssub.s32 %s15, 2
        // Predicated region
        $region45: #{tpu_custom_call.1} parent=43 // pred_check
          %p464 = pneg %p112
        $region46: #{tpu_custom_call.1} parent=43 // pred_check_branch
          %466 = sbr.rel (%p464) target = $region48
        $region47: #{tpu_custom_call.1} parent=43 // pred_region
          %s467 = sand.u32 %s97, 1
          %s468 = scalar_lea.sflag [#allocation4], %s467
          %s469 = sand.u32 %s97, 1
          %s470 = smul.addr %s469, 64
          %s471 = scalar_lea.vmem [#allocation5], %s470
          %473 = dma.done %s468, 1024
        $region48: #{tpu_custom_call.1} parent=43 // pred_fallthru
          _
      $region44: #{tpu_custom_call.1} parent=5 // pred_fallthru
        _
    $region6: #{tpu_custom_call.1} parent=1 // loop_footer
      %s19 = sadd.s32 1, %s15
    $region7: #{tpu_custom_call.1} parent=1 // loop_footer_branch
      %14 = sbr.rel target = $region3
    $region8: #{tpu_custom_call.1} parent=1 // loop_exit
      _
    %474 = vsyncpa [#allocation3], 1
    %s475 = scalar_lea.sflag [#allocation3], 1
    %476 = vsyncpa %s475, 1
    %477 = vsyncpa [#allocation4], 1
    %s478 = scalar_lea.sflag [#allocation4], 1
    %479 = vsyncpa %s478, 1

</llo_original>
